<compile_context>
chip_gen: v5e
topology: v5e:2x2
jax: 0.10.0
libtpu: 0.0.40
codegen_flags: <defaults>
</compile_context>

<pallas_src>
import math
from functools import partial

import jax
import jax.numpy as jnp
from jax import lax
from jax.experimental import pallas as pl
from jax.experimental.pallas import tpu as pltpu

_INV_SQRT2 = 1.0 / math.sqrt(2.0)
_SQRT_2_OVER_PI = math.sqrt(2.0 / math.pi)


def _round_up(n, m):
    return ((n + m - 1) // m) * m


def _cdiv(a, b):
    return (a + b - 1) // b


def _vmem_capacity_bytes():
    """Physical VMEM of the current chip; conservative fallback if unknown."""
    try:
        info = pltpu.get_tpu_info()
        cap = int(getattr(info, "vmem_capacity_bytes", 0))
        if cap > 0:
            return cap
    except Exception:
        pass
    return 64 << 20  # v7x per-TensorCore size: safe lower bound everywhere


def _dense_block_kernel(x_ref, w_ref, b_ref, o_ref, *, exact_gelu):
    # x_ref: (TL, C); w_ref: (C, TN); b_ref: (1, TN); o_ref: (TL, TN)
    x = x_ref[...]
    w = w_ref[...]
    # Canonical (M, K) x (K, N) on the MXU, f32 accumulation.
    y = jnp.dot(x, w, preferred_element_type=jnp.float32)
    y = y + b_ref[...].astype(jnp.float32)
    if exact_gelu:
        # Matches nn.GELU() default (approximate='none').
        g = 0.5 * y * (1.0 + lax.erf(y * _INV_SQRT2))
    else:
        # tanh approximation -> EUP (otherwise-idle bundle slot on v5e).
        g = 0.5 * y * (1.0 + jnp.tanh(_SQRT_2_OVER_PI * (y + 0.044715 * y * y * y)))
    o_ref[...] = g.astype(o_ref.dtype)


def dense_block(x, weight, bias, *, exact_gelu=True, max_row_tile=8192,
                _force_oc_tiling=False):
    """DenseBlock forward: 1x1 conv (per-pixel linear) + GELU.

    x: (B, L, C); weight: (OC, C) (Conv2d weight squeezed); bias: (OC,).
    Returns (B, L, OC).
    """
    B, L, C = x.shape
    OC = weight.shape[0]
    rows = B * L
    dtype = x.dtype
    itemsize = jnp.dtype(dtype).itemsize
    # Sublane tile of the dtype: f32 -> 8, bf16 -> 16, int8/fp8 -> 32.
    sub = max(8, 32 // itemsize)

    # Generation-aware VMEM budget; rest is headroom for Mosaic scratch.
    cap = _vmem_capacity_bytes()
    budget = (cap * 72) // 100

    # Flatten (B, L) -> rows; weight -> (C, OC) once (tiny, wrapper-side).
    x2 = x.reshape(rows, C)
    w_t = jnp.transpose(weight)  # (C, OC)
    kernel = partial(_dense_block_kernel, exact_gelu=exact_gelu)

    # At least 2 (prefer 4) row tiles so v7x's dual TensorCores both get work;
    # extra grid steps cost ~0.35 us each (noise for a mem-bound kernel).
    min_steps = min(4, _cdiv(rows, sub))

    # Resident-weight footprint (Pallas double-buffers even constant blocks).
    w_resident = 2 * (C * OC + OC) * itemsize

    if not _force_oc_tiling and w_resident <= budget // 2:
        # ---- Main path: weight fully VMEM-resident, 1-D grid over rows. ----
        per_row = 2 * (C + OC) * itemsize  # double-buffered x + out tiles
        tl_cap = max(sub, (budget - w_resident) // max(per_row, 1))
        tl_cap = max(sub, min(max_row_tile, (tl_cap // sub) * sub))

        n_steps = max(min_steps, _cdiv(rows, tl_cap))
        TL = _round_up(_cdiv(rows, n_steps), sub)
        rows_p = n_steps * TL

        x_p = x2 if rows_p == rows else jnp.pad(x2, ((0, rows_p - rows), (0, 0)))
        b_p = bias.reshape(1, OC)

        need = per_row * TL + w_resident
        cost = pl.CostEstimate(
            flops=2 * rows_p * C * OC,
            transcendentals=rows_p * OC,
            bytes_accessed=itemsize * (rows_p * C + C * OC + OC + rows_p * OC),
        )

        out_p = pl.pallas_call(
            kernel,
            out_shape=jax.ShapeDtypeStruct((rows_p, OC), dtype),
            grid_spec=pltpu.PrefetchScalarGridSpec(
                num_scalar_prefetch=0,
                grid=(n_steps,),
                in_specs=[
                    pl.BlockSpec((TL, C), lambda i: (i, 0)),
                    pl.BlockSpec((C, OC), lambda i: (0, 0)),   # resident weight
                    pl.BlockSpec((1, OC), lambda i: (0, 0)),   # resident bias
                ],
                out_specs=pl.BlockSpec((TL, OC), lambda i: (i, 0)),
            ),
            compiler_params=pltpu.CompilerParams(
                dimension_semantics=("parallel",),
                vmem_limit_bytes=int(min(cap, max(need + (8 << 20), 32 << 20))),
            ),
            cost_estimate=cost,
        )(x_p, w_t, b_p)

        out = out_p if rows_p == rows else out_p[:rows]
        return out.reshape(B, L, OC)

    # ---- Fallback: weight too large for resident VMEM -> tile OC. ----
    # Keeps vmem_limit_bytes within physical VMEM (esp. v7x 64 MiB).
    # TODO(synk): add a K (C) grid axis + f32 VMEM accumulator for very large C.
    OCp = _round_up(OC, 128)
    tn_cap = (budget // 2) // max(2 * C * itemsize, 1)
    TN = min(OCp, max(128, (tn_cap // 128) * 128))
    n_oc = _cdiv(OCp, TN)
    OCp = n_oc * TN

    w_tile = 2 * (C * TN + TN) * itemsize
    per_row = 2 * (C + TN) * itemsize
    tl_cap = max(sub, (budget - w_tile) // max(per_row, 1))
    tl_cap = max(sub, min(max_row_tile, (tl_cap // sub) * sub))

    n_steps = max(min_steps, _cdiv(rows, tl_cap))
    TL = _round_up(_cdiv(rows, n_steps), sub)
    rows_p = n_steps * TL

    x_p = x2 if rows_p == rows else jnp.pad(x2, ((0, rows_p - rows), (0, 0)))
    w_p = jnp.pad(w_t, ((0, 0), (0, OCp - OC)))
    b_p = jnp.pad(bias, (0, OCp - OC)).reshape(1, OCp)

    need = per_row * TL + w_tile
    cost = pl.CostEstimate(
        flops=2 * rows_p * C * OCp,
        transcendentals=rows_p * OCp,
        bytes_accessed=itemsize * (rows_p * C * n_oc + C * OCp + OCp + rows_p * OCp),
    )

    # Grid: OC tiles outer (weight tile resident across inner row loop),
    # rows inner.
    out_p = pl.pallas_call(
        kernel,
        out_shape=jax.ShapeDtypeStruct((rows_p, OCp), dtype),
        grid_spec=pltpu.PrefetchScalarGridSpec(
            num_scalar_prefetch=0,
            grid=(n_oc, n_steps),
            in_specs=[
                pl.BlockSpec((TL, C), lambda n, i: (i, 0)),
                pl.BlockSpec((C, TN), lambda n, i: (0, n)),
                pl.BlockSpec((1, TN), lambda n, i: (0, n)),
            ],
            out_specs=pl.BlockSpec((TL, TN), lambda n, i: (i, n)),
        ),
        compiler_params=pltpu.CompilerParams(
            dimension_semantics=("parallel", "parallel"),
            vmem_limit_bytes=int(min(cap, max(need + (8 << 20), 32 << 20))),
        ),
        cost_estimate=cost,
    )(x_p, w_p, b_p)

    return out_p[:rows, :OC].reshape(B, L, OC)


if __name__ == "__main__":
    # Small shapes consistent with the module: B=2, L=16 (H=W=4), C=4, OC=8.
    B, L, C, OC = 2, 16, 4, 8

    key = jax.random.PRNGKey(0)
    kx, kw, kb = jax.random.split(key, 3)

    x = jax.random.normal(kx, (B, L, C), dtype=jnp.float32)
    # Conv2d weight is (OC, C, 1, 1) -> squeeze to (OC, C).
    weight = jax.random.normal(kw, (OC, C), dtype=jnp.float32) * (1.0 / math.sqrt(C))
    bias = jax.random.normal(kb, (OC,), dtype=jnp.float32) * 0.1

    # Pure-JAX reference for the exact same math.
    ref = jax.nn.gelu(jnp.einsum("blc,oc->blo", x, weight) + bias, approximate=False)

    # Main (resident-weight) path.
    out = jax.block_until_ready(dense_block(x, weight, bias))
    assert out.shape == (B, L, OC)
    assert jnp.allclose(out, ref, atol=1e-5, rtol=1e-5), "mismatch (main path)"

    # Exercise the OC-tiled fallback path too (large-weight safety net).
    out2 = jax.block_until_ready(dense_block(x, weight, bias, _force_oc_tiling=True))
    assert out2.shape == (B, L, OC)
    assert jnp.allclose(out2, ref, atol=1e-5, rtol=1e-5), "mismatch (OC-tiled path)"

    print("KERNEL_OK")
</pallas_src>

<mosaic_0001>
module attributes {stable_mosaic.version = 11 : i64} {
  func.func @_dense_block_kernel(%arg0: i32, %arg1: memref<8x4xf32, #tpu.memory_space<vmem>>, %arg2: memref<4x8xf32, #tpu.memory_space<vmem>>, %arg3: memref<1x8xf32, #tpu.memory_space<vmem>>, %arg4: memref<8x8xf32, #tpu.memory_space<vmem>>) attributes {dimension_semantics = [#tpu.dimension_semantics<parallel>], iteration_bounds = array<i64: 4>, scalar_prefetch = 0 : i64, scratch_operands = 0 : i64, tpu.core_type = #tpu.core_type<tc>, window_params = [{transform_indices = @transform_0, window_bounds = array<i64: 8, 4>}, {pipeline_mode = #tpu.pipeline_mode<synchronous>, transform_indices = @transform_1, window_bounds = array<i64: 4, 8>}, {pipeline_mode = #tpu.pipeline_mode<synchronous>, transform_indices = @transform_2, window_bounds = array<i64: 1, 8>}, {transform_indices = @transform_3, window_bounds = array<i64: 8, 8>}]} {
    %c0 = arith.constant 0 : index
    %c0_0 = arith.constant 0 : index
    %0 = vector.load %arg1[%c0, %c0_0] : memref<8x4xf32, #tpu.memory_space<vmem>>, vector<8x4xf32>
    %c0_1 = arith.constant 0 : index
    %c0_2 = arith.constant 0 : index
    %1 = vector.load %arg2[%c0_1, %c0_2] : memref<4x8xf32, #tpu.memory_space<vmem>>, vector<4x8xf32>
    %cst = arith.constant dense<0.000000e+00> : vector<8x8xf32>
    %2 = tpu.matmul %0, %1, %cst {dimension_numbers = #tpu.dot_dimension_numbers<[1], [0], [0], [1], [0, 0, 1, 1], [], []>} : vector<8x4xf32>, vector<4x8xf32>, vector<8x8xf32> -> vector<8x8xf32>
    %c0_3 = arith.constant 0 : index
    %c0_4 = arith.constant 0 : index
    %3 = vector.load %arg3[%c0_3, %c0_4] : memref<1x8xf32, #tpu.memory_space<vmem>>, vector<1x8xf32>
    %4 = vector.broadcast %3 : vector<1x8xf32> to vector<8x8xf32>
    %5 = arith.addf %2, %4 : vector<8x8xf32>
    %cst_5 = arith.constant 5.000000e-01 : f32
    %6 = vector.broadcast %cst_5 : f32 to vector<8x8xf32>
    %7 = arith.mulf %6, %5 : vector<8x8xf32>
    %cst_6 = arith.constant 0.707106769 : f32
    %8 = vector.broadcast %cst_6 : f32 to vector<8x8xf32>
    %9 = arith.mulf %5, %8 : vector<8x8xf32>
    %10 = math.erf %9 : vector<8x8xf32>
    %cst_7 = arith.constant 1.000000e+00 : f32
    %11 = vector.broadcast %cst_7 : f32 to vector<8x8xf32>
    %12 = arith.addf %11, %10 : vector<8x8xf32>
    %13 = arith.mulf %7, %12 : vector<8x8xf32>
    %c0_8 = arith.constant 0 : index
    %c0_9 = arith.constant 0 : index
    %14 = vector.load %arg4[%c0_8, %c0_9] : memref<8x8xf32, #tpu.memory_space<vmem>>, vector<8x8xf32>
    tpu.vector_store %arg4[%c0_8, %c0_9], %13 {strides = array<i32>} : memref<8x8xf32, #tpu.memory_space<vmem>>, vector<8x8xf32>,
    return
  }
  func.func @transform_0(%arg0: i32) -> (i32, i32) {
    %c0_i32 = arith.constant 0 : i32
    %c0_i32_0 = arith.constant 0 : i32
    return %arg0, %c0_i32 : i32, i32
  }
  func.func @transform_1(%arg0: i32) -> (i32, i32) {
    %c0_i32 = arith.constant 0 : i32
    %c0_i32_0 = arith.constant 0 : i32
    %c0_i32_1 = arith.constant 0 : i32
    return %c0_i32, %c0_i32_0 : i32, i32
  }
  func.func @transform_2(%arg0: i32) -> (i32, i32) {
    %c0_i32 = arith.constant 0 : i32
    %c0_i32_0 = arith.constant 0 : i32
    %c0_i32_1 = arith.constant 0 : i32
    return %c0_i32, %c0_i32_0 : i32, i32
  }
  func.func @transform_3(%arg0: i32) -> (i32, i32) {
    %c0_i32 = arith.constant 0 : i32
    %c0_i32_0 = arith.constant 0 : i32
    return %arg0, %c0_i32 : i32, i32
  }
}

</mosaic_0001>

<llo_original>
// kernel: tpu_custom_call.1
$region0: #{tpu_custom_call.1}
  #allocation0 [shape = 'u32[]', space=smem, size = 0x4, offset = 0x4, fixed_abs, tag = 'smem constant byte address 0x4 - core index']
  #allocation1 [shape = 'u32[72,128]{1,0:T(1,128)}', space=vmem, size = 0x9000, scoped, tag = 'internal scratch']
  %s0 = inlined_call_operand.vmem [shape: f32[32,4], index: 0, kind: input, shape index: {}]
  %s1 = inlined_call_operand.vmem [shape: f32[4,8], index: 1, kind: input, shape index: {}]
  %s2 = inlined_call_operand.vmem [shape: f32[1,8], index: 2, kind: input, shape index: {}]
  %s3 = inlined_call_operand.vmem [shape: f32[32,8], index: 3, kind: output, shape index: {}]
  %s4 = sld [smem:[#allocation0]]
  $region45: #{tpu_custom_call.1} parent=0
    _
  %s6 = ssub.s32 1, %s4
  %s7 = scalar_select 0, %s6, %s4
  loop: start=0, step=1, limit=6
  $region2: #{tpu_custom_call.1} parent=0 // loop_pre_header
    _
  $region3: #{tpu_custom_call.1} parent=0 // loop_header
    %s9 = sphi 0, %s13
    %p10 = scmp.ge.s32.totalorder %s9, 6
    %s19 = sphi 0, %s21
    %s22 = sphi 0, %s19
    %s23 = sphi 0, %s22
    %s39 = sphi 0, %s23
    %s43 = sphi 0, %s43
    %s45 = sphi 0, %s43
    %s46 = sphi 0, %s45
    %s60 = sphi 0, %s46
    %s64 = sphi 0, %s64
    %s66 = sphi 0, %s64
    %s67 = sphi 0, %s66
    %s81 = sphi 0, %s67
    %s87 = sphi 0, %s89
    %s90 = sphi 0, %s87
    %s91 = sphi 0, %s90
    %s107 = sphi 0, %s91
  $region4: #{tpu_custom_call.1} parent=0 // loop_header_branch
    %12 = sbr.rel (%p10) target = $region8
  $region5: #{tpu_custom_call.1} parent=0 // loop_body
    %s14 = ssub.s32 %s9, 1
    %s15 = ssub.s32 %s9, 2
    %s16 = sadd.s32 %s9, 1
    %s17 = ssub.s32 %s9, %s16
    %p18 = scmp.eq.s32.totalorder %s17, 0
    %s20 = sadd.s32 %s19, 1
    %s21 = scalar_select %p18, %s19, %s20
    %p24 = pneg %p18
    %p25 = scmp.eq.s32.totalorder %s9, 3
    %p26 = por %p24, %p25
    %p27 = scmp.ne.s32.totalorder %s19, %s22
    %p28 = scmp.eq.s32.totalorder %s9, 0
    %p29 = por %p27, %p28
    %p30 = scmp.ne.s32.totalorder %s19, %s22
    %p31 = scmp.eq.s32.totalorder %s14, 3
    %p32 = por %p30, %p31
    %p33 = scmp.ne.s32.totalorder %s22, %s23
    %p34 = scmp.eq.s32.totalorder %s14, 0
    %p35 = por %p33, %p34
    %p36 = scmp.ne.s32.totalorder %s22, %s23
    %p37 = scmp.eq.s32.totalorder %s15, 3
    %p38 = por %p36, %p37
    %p40 = scmp.ne.s32.totalorder %s23, %s39
    %p41 = scmp.eq.s32.totalorder %s15, 0
    %p42 = por %p40, %p41
    %s44 = sadd.s32 %s43, 1
    %p47 = scmp.eq.s32.totalorder %s9, 3
    %p48 = scmp.ne.s32.totalorder %s43, %s45
    %p49 = scmp.eq.s32.totalorder %s9, 0
    %p50 = por %p48, %p49
    %p51 = scmp.ne.s32.totalorder %s43, %s45
    %p52 = scmp.eq.s32.totalorder %s14, 3
    %p53 = por %p51, %p52
    %p54 = scmp.ne.s32.totalorder %s45, %s46
    %p55 = scmp.eq.s32.totalorder %s14, 0
    %p56 = por %p54, %p55
    %p57 = scmp.ne.s32.totalorder %s45, %s46
    %p58 = scmp.eq.s32.totalorder %s15, 3
    %p59 = por %p57, %p58
    %p61 = scmp.ne.s32.totalorder %s46, %s60
    %p62 = scmp.eq.s32.totalorder %s15, 0
    %p63 = por %p61, %p62
    %s65 = sadd.s32 %s64, 1
    %p68 = scmp.eq.s32.totalorder %s9, 3
    %p69 = scmp.ne.s32.totalorder %s64, %s66
    %p70 = scmp.eq.s32.totalorder %s9, 0
    %p71 = por %p69, %p70
    %p72 = scmp.ne.s32.totalorder %s64, %s66
    %p73 = scmp.eq.s32.totalorder %s14, 3
    %p74 = por %p72, %p73
    %p75 = scmp.ne.s32.totalorder %s66, %s67
    %p76 = scmp.eq.s32.totalorder %s14, 0
    %p77 = por %p75, %p76
    %p78 = scmp.ne.s32.totalorder %s66, %s67
    %p79 = scmp.eq.s32.totalorder %s15, 3
    %p80 = por %p78, %p79
    %p82 = scmp.ne.s32.totalorder %s67, %s81
    %p83 = scmp.eq.s32.totalorder %s15, 0
    %p84 = por %p82, %p83
    %s85 = ssub.s32 %s9, %s16
    %p86 = scmp.eq.s32.totalorder %s85, 0
    %s88 = sadd.s32 %s87, 1
    %s89 = scalar_select %p86, %s87, %s88
    %p92 = pneg %p86
    %p93 = scmp.eq.s32.totalorder %s9, 3
    %p94 = por %p92, %p93
    %p95 = scmp.ne.s32.totalorder %s87, %s90
    %p96 = scmp.eq.s32.totalorder %s9, 0
    %p97 = por %p95, %p96
    %p98 = scmp.ne.s32.totalorder %s87, %s90
    %p99 = scmp.eq.s32.totalorder %s14, 3
    %p100 = por %p98, %p99
    %p101 = scmp.ne.s32.totalorder %s90, %s91
    %p102 = scmp.eq.s32.totalorder %s14, 0
    %p103 = por %p101, %p102
    %p104 = scmp.ne.s32.totalorder %s90, %s91
    %p105 = scmp.eq.s32.totalorder %s15, 3
    %p106 = por %p104, %p105
    %p108 = scmp.ne.s32.totalorder %s91, %s107
    %p109 = scmp.eq.s32.totalorder %s15, 0
    %p110 = por %p108, %p109
    %p111 = scmp.le.s32.totalorder 1, %s9
    %p112 = scmp.lt.s32.totalorder %s9, 5
    %p113 = pnand %p111, %p112
    %p114 = pneg %p113
    // Predicated region
    $region9: #{tpu_custom_call.1} parent=5 // pred_check
      _
    $region10: #{tpu_custom_call.1} parent=5 // pred_check_branch
      %116 = sbr.rel (%p113) target = $region12
    $region11: #{tpu_custom_call.1} parent=5 // pred_region
      %s117 = ssub.s32 %s9, 1
      // Predicated region
      $region13: #{tpu_custom_call.1} parent=11 // pred_check
        %p118 = pneg %p56
      $region14: #{tpu_custom_call.1} parent=11 // pred_check_branch
        %120 = sbr.rel (%p118) target = $region16
      $region15: #{tpu_custom_call.1} parent=11 // pred_region
        _
      $region16: #{tpu_custom_call.1} parent=11 // pred_fallthru
        _
      // Predicated region
      $region17: #{tpu_custom_call.1} parent=11 // pred_check
        %p121 = pneg %p77
      $region18: #{tpu_custom_call.1} parent=11 // pred_check_branch
        %123 = sbr.rel (%p121) target = $region20
      $region19: #{tpu_custom_call.1} parent=11 // pred_region
        _
      $region20: #{tpu_custom_call.1} parent=11 // pred_fallthru
        _
    $region12: #{tpu_custom_call.1} parent=5 // pred_fallthru
      _
    %p124 = scmp.lt.s32.totalorder %s9, 4
    // Predicated region
    $region21: #{tpu_custom_call.1} parent=5 // pred_check
      %p125 = pneg %p124
    $region22: #{tpu_custom_call.1} parent=5 // pred_check_branch
      %127 = sbr.rel (%p125) target = $region24
    $region23: #{tpu_custom_call.1} parent=5 // pred_region
      // Predicated region
      $region25: #{tpu_custom_call.1} parent=23 // pred_check
        %p128 = pneg %p29
      $region26: #{tpu_custom_call.1} parent=23 // pred_check_branch
        %130 = sbr.rel (%p128) target = $region28
      $region27: #{tpu_custom_call.1} parent=23 // pred_region
        %p131 = scmp.lt.s32.totalorder %s9, 3
        %s132 = scalar_select %p131, %s9, 3
        %s133 = smul.addr %s132, 8
        %s134 = scalar_lea.vmem %s0, %s133
      $region28: #{tpu_custom_call.1} parent=23 // pred_fallthru
        _
    $region24: #{tpu_custom_call.1} parent=5 // pred_fallthru
      _
    %p135 = scmp.le.s32.totalorder 1, %s9
    %p136 = scmp.lt.s32.totalorder %s9, 5
    %p137 = pnand %p135, %p136
    %p138 = pneg %p137
    // Predicated region
    $region29: #{tpu_custom_call.1} parent=5 // pred_check
      _
    $region30: #{tpu_custom_call.1} parent=5 // pred_check_branch
      %140 = sbr.rel (%p137) target = $region32
    $region31: #{tpu_custom_call.1} parent=5 // pred_region
      %s141 = ssub.s32 %s9, 1
      %p142 = scmp.lt.s32.totalorder %s14, 3
      %s143 = scalar_select %p142, %s14, 3
      %s144 = smul.addr %s143, 8
      %s145 = scalar_lea.vmem %s0, %s144
      %p146 = pneg %p35
      %p147 = pneg %p32
      %p148 = pneg %p56
      %p149 = pneg %p53
      %p150 = pneg %p77
      %p151 = pneg %p74
      %p152 = pneg %p103
      %p153 = pneg %p100
      %p154 = scmp.lt.s32.totalorder %s14, 3
      %s155 = scalar_select %p154, %s14, 3
      %s156 = smul.addr %s155, 8
      %s157 = scalar_lea.vmem %s3, %s156
      %p158 = scmp.lt.s32.totalorder %s14, 3
      %s159 = scalar_select %p158, %s14, 3
      %s160 = smul.addr %s159, 8
      %s161 = scalar_lea.vmem %s0, %s160
      %p162 = scmp.lt.s32.totalorder %s14, 3
      %s163 = scalar_select %p162, %s14, 3
      %s164 = smul.addr %s163, 8
      %s165 = scalar_lea.vmem %s3, %s164
      %v166 = vld [vmem:[%s161] sm:$0xff]
      %v167 = vld [vmem:[%s1] sm:$0xf]
      %v168 = vld [vmem:[%s2] sm:$0x1]
      %v170 = vperm.slane %v168, 0
      %vm172 = vcmask 31744
      %v174 = vsel %vm172, %v166, 0
      %vm176 = vcmask 1043456
      %v178 = vsel %vm176, %v167, 0
      %180 = vmatpush.msra.mxu0 0.0
      %181 = vmatpush.msra.mxu0 0.0
      %182 = vmatpush.msra.mxu0 0.0
      %183 = vmatpush.msra.mxu0 0.0
      %184 = vmatpush.msra.mxu0 0.0
      %185 = vmatpush.msra.mxu0 0.0
      %186 = vmatpush.msra.mxu0 0.0
      %187 = vmatpush.msra.mxu0 0.0
      %188 = vmatpush.msra.mxu0 0.0
      %189 = vmatpush.msra.mxu0 0.0
      %190 = vmatpush.msra.mxu0 0.0
      %191 = vmatpush.msra.mxu0 0.0
      %192 = vmatpush.msra.mxu0 0.0
      %193 = vmatpush.msra.mxu0 0.0
      %194 = vmatpush.msra.mxu0 0.0
      %195 = vmatpush.msra.mxu0 %v178
      %196 = vmatmul.f32.gmra.mxu0 %v174
      %v197 = vpop.f32.mrf.mxu0
      %v198 = vadd.f32 %v170, %v197
      %199 = vdwg.mxu0
      %v200 = vmul.f32 %v198, 0.5
      %v201 = vmul.f32 %v198, 0.70710677
      %v202 = vmul.f32 %v201, %v201
      %v203 = vmin.f32 16.0, %v202
      %v204 = vmul.f32 %v203, 2.1237322e-06
      %v205 = vadd.f32 %v204, 0.00028619796
      %v206 = vmul.f32 %v203, %v205
      %v207 = vadd.f32 %v206, 0.0036580483
      %v208 = vmul.f32 %v203, %v207
      %v209 = vadd.f32 %v208, 0.05243302
      %v210 = vmul.f32 %v203, %v209
      %v211 = vadd.f32 %v210, 0.18741608
      %v212 = vmul.f32 %v203, %v211
      %v213 = vadd.f32 %v212, 1.1283791
      %v214 = vmul.f32 %v201, %v213
      %v215 = vmul.f32 %v203, 3.8918573e-05
      %v216 = vadd.f32 %v215, 0.001143296
      %v217 = vmul.f32 %v203, %v216
      %v218 = vadd.f32 %v217, 0.014752088
      %v219 = vmul.f32 %v203, %v218
      %v220 = vadd.f32 %v219, 0.112945676
      %v221 = vmul.f32 %v203, %v220
      %v222 = vadd.f32 %v221, 0.4994258
      %v223 = vmul.f32 %v203, %v222
      %v224 = vadd.f32 %v223, 1.0
      %v225 = vrcp.pop %v224
      %v226 = vmul.f32 %v224, %v225
      %v227 = vsub.f32 1.0, %v226
      %v228 = vmul.f32 %v225, %v227
      %v229 = vadd.f32 %v225, %v228
      %vm230 = vweird.f32 %v224
      %vm231 = vweird.f32 %v225
      %vm232 = vmor %vm230, %vm231
      %v233 = vsel %vm232, %v225, %v229
      %v234 = vand.u32 2147483647, %v224
      %vm235 = vcmp.eq.f32.partialorder %v234, 8.507059e+37
      %v236 = vand.u32 %v224, 2147483648
      %v237 = vor.u32 1.1754944e-38, %v236
      %v238 = vsel %vm235, %v237, %v233
      %v239 = vmul.f32 %v214, %v238
      %v240 = vmin.f32 %v239, 1.0
      %v241 = vmax.f32 %v240, -1.0
      %v242 = vadd.f32 %v241, 1.0
      %v243 = vmul.f32 %v200, %v242
      %vm244 = vcmask 64512
      %245 = vst.msk [vmem:[%s165] sm:$0xff] %vm244, %v243
      %p246 = scmp.lt.s32.totalorder %s14, 3
      %s247 = scalar_select %p246, %s14, 3
      %s248 = smul.addr %s247, 8
      %s249 = scalar_lea.vmem %s3, %s248
      // Predicated region
      $region33: #{tpu_custom_call.1} parent=31 // pred_check
        %p250 = pneg %p100
      $region34: #{tpu_custom_call.1} parent=31 // pred_check_branch
        %252 = sbr.rel (%p250) target = $region36
      $region35: #{tpu_custom_call.1} parent=31 // pred_region
        _
      $region36: #{tpu_custom_call.1} parent=31 // pred_fallthru
        _
    $region32: #{tpu_custom_call.1} parent=5 // pred_fallthru
      _
    %p253 = scmp.le.s32.totalorder 2, %s9
    // Predicated region
    $region37: #{tpu_custom_call.1} parent=5 // pred_check
      %p254 = pneg %p253
    $region38: #{tpu_custom_call.1} parent=5 // pred_check_branch
      %256 = sbr.rel (%p254) target = $region40
    $region39: #{tpu_custom_call.1} parent=5 // pred_region
      %s257 = ssub.s32 %s9, 2
      // Predicated region
      $region41: #{tpu_custom_call.1} parent=39 // pred_check
        %p258 = pneg %p106
      $region42: #{tpu_custom_call.1} parent=39 // pred_check_branch
        %260 = sbr.rel (%p258) target = $region44
      $region43: #{tpu_custom_call.1} parent=39 // pred_region
        %p261 = scmp.lt.s32.totalorder %s15, 3
        %s262 = scalar_select %p261, %s15, 3
        %s263 = smul.addr %s262, 8
        %s264 = scalar_lea.vmem %s3, %s263
      $region44: #{tpu_custom_call.1} parent=39 // pred_fallthru
        _
    $region40: #{tpu_custom_call.1} parent=5 // pred_fallthru
      _
  $region6: #{tpu_custom_call.1} parent=0 // loop_footer
    %s13 = sadd.s32 1, %s9
  $region7: #{tpu_custom_call.1} parent=0 // loop_footer_branch
    %8 = sbr.rel target = $region3
  $region8: #{tpu_custom_call.1} parent=0 // loop_exit
    _

</llo_original>
